<compile_context>
chip_gen: v7x
topology: tpu7x:2x2x1
jax: 0.10.0
libtpu: 0.0.40
codegen_flags: <defaults>
</compile_context>

<pallas_src>
import functools

import jax
import jax.numpy as jnp
from jax.experimental import pallas as pl
from jax.experimental.pallas import tpu as pltpu


def _linear_decoder_kernel(z_ref, w_ref, o_ref, *, num_filts, neck, in_dim):
    """All filters in one invocation.

    z_ref: (B, num_filts * neck)       -- codes, lane-contiguous per filter
    w_ref: (num_filts, neck, in_dim)   -- native nn.Linear weight layout
    o_ref: (B, num_filts * in_dim)     -- lane-dense reconstruction slab
    """
    # Short static loop (num_filts is small); unrolled at trace time so the
    # compiler schedules the per-filter MXU matmuls back-to-back.
    for l in range(num_filts):
        z_l = z_ref[:, pl.ds(l * neck, neck)]          # (B, neck)
        w_l = w_ref[l]                                 # (neck, in_dim)
        # x_hat_l = z_l @ W_l  (decoder applies the encoder weight transposed;
        # in this layout that is a plain matmul -> no operand transpose).
        x_l = jnp.dot(z_l, w_l, preferred_element_type=jnp.float32)
        # in_dim is a multiple of 128 -> unmasked, lane-aligned store.
        o_ref[:, pl.ds(l * in_dim, in_dim)] = x_l.astype(o_ref.dtype)


def linear_decoder(z, weights, size):
    """z: (B, C, neck_dim) float32; weights: (C, neck_dim, in_dim), i.e. each
    filter's nn.Linear(in_dim, neck_dim).weight in its native layout.

    Returns x_hat: (B, C, H, W) float32.
    """
    num_filts, H, W = size
    B, C, neck = z.shape
    in_dim = H * W
    assert C == num_filts
    assert weights.shape == (C, neck, in_dim)

    # Free, contiguous reshape (no HBM transpose pass).
    z_flat = z.reshape(B, C * neck)

    out_flat = pl.pallas_call(
        functools.partial(
            _linear_decoder_kernel, num_filts=C, neck=neck, in_dim=in_dim),
        out_shape=jax.ShapeDtypeStruct((B, C * in_dim), jnp.float32),
        in_specs=[
            pl.BlockSpec(memory_space=pltpu.MemorySpace.VMEM),
            pl.BlockSpec(memory_space=pltpu.MemorySpace.VMEM),
        ],
        out_specs=pl.BlockSpec(memory_space=pltpu.MemorySpace.VMEM),
    )(z_flat, weights)

    # Free, contiguous reshape back to NCHW.
    return out_flat.reshape(B, C, H, W)


def _reference(z, weights, size):
    """Pure-JAX reference for correctness checking."""
    num_filts, H, W = size
    B = z.shape[0]
    x = jnp.einsum("bcn,cni->bci", z, weights)         # (B, C, in_dim)
    return x.reshape(B, num_filts, H, W)


if __name__ == "__main__":
    # Module config: size = (num_filts, H, W), neck_dim; k is unused in the
    # decoder forward.
    num_filts, H, W = 4, 16, 16
    neck_dim = 32
    batch = 2
    in_dim = H * W

    key = jax.random.PRNGKey(0)
    kz, kw = jax.random.split(key)
    z = jax.random.normal(kz, (batch, num_filts, neck_dim), dtype=jnp.float32)
    # Deterministic synthetic weights, shaped like nn.Linear(in_dim, neck).weight
    bound = 1.0 / (in_dim ** 0.5)
    weights = jax.random.uniform(
        kw, (num_filts, neck_dim, in_dim), dtype=jnp.float32,
        minval=-bound, maxval=bound)

    x_hat = linear_decoder(z, weights, size=(num_filts, H, W))
    x_hat = jax.block_until_ready(x_hat)

    ref = _reference(z, weights, (num_filts, H, W))
    assert x_hat.shape == (batch, num_filts, H, W)
    assert jnp.allclose(x_hat, ref, atol=1e-5, rtol=1e-5), "mismatch vs reference"

    print("KERNEL_OK")
</pallas_src>

<mosaic_0001>
module attributes {stable_mosaic.version = 11 : i64} {
  func.func @_linear_decoder_kernel(%arg0: memref<2x128xf32, #tpu.memory_space<vmem>>, %arg1: memref<4x32x256xf32, #tpu.memory_space<vmem>>, %arg2: memref<2x1024xf32, #tpu.memory_space<vmem>>) attributes {dimension_semantics = [], scalar_prefetch = 0 : i64, scratch_operands = 0 : i64, tpu.core_type = #tpu.core_type<tc>} {
    %c0 = arith.constant 0 : index
    %c0_0 = arith.constant 0 : index
    %0 = vector.load %arg0[%c0, %c0_0] : memref<2x128xf32, #tpu.memory_space<vmem>>, vector<2x32xf32>
    %c0_1 = arith.constant 0 : index
    %c0_2 = arith.constant 0 : index
    %c0_3 = arith.constant 0 : index
    %1 = vector.load %arg1[%c0_1, %c0_2, %c0_3] : memref<4x32x256xf32, #tpu.memory_space<vmem>>, vector<1x32x256xf32>
    %2 = vector.shape_cast %1 : vector<1x32x256xf32> to vector<32x256xf32>
    %cst = arith.constant dense<0.000000e+00> : vector<2x256xf32>
    %3 = tpu.matmul %0, %2, %cst {dimension_numbers = #tpu.dot_dimension_numbers<[1], [0], [0], [1], [0, 0, 1, 1], [], []>} : vector<2x32xf32>, vector<32x256xf32>, vector<2x256xf32> -> vector<2x256xf32>
    %c0_4 = arith.constant 0 : index
    %c0_5 = arith.constant 0 : index
    %4 = vector.load %arg2[%c0_4, %c0_5] : memref<2x1024xf32, #tpu.memory_space<vmem>>, vector<2x256xf32>
    tpu.vector_store %arg2[%c0_4, %c0_5], %3 {strides = array<i32>} : memref<2x1024xf32, #tpu.memory_space<vmem>>, vector<2x256xf32>,
    %c0_6 = arith.constant 0 : index
    %c32 = arith.constant 32 : index
    %5 = vector.load %arg0[%c0_6, %c32] : memref<2x128xf32, #tpu.memory_space<vmem>>, vector<2x32xf32>
    %c1 = arith.constant 1 : index
    %c0_7 = arith.constant 0 : index
    %c0_8 = arith.constant 0 : index
    %6 = vector.load %arg1[%c1, %c0_7, %c0_8] : memref<4x32x256xf32, #tpu.memory_space<vmem>>, vector<1x32x256xf32>
    %7 = vector.shape_cast %6 : vector<1x32x256xf32> to vector<32x256xf32>
    %cst_9 = arith.constant dense<0.000000e+00> : vector<2x256xf32>
    %8 = tpu.matmul %5, %7, %cst_9 {dimension_numbers = #tpu.dot_dimension_numbers<[1], [0], [0], [1], [0, 0, 1, 1], [], []>} : vector<2x32xf32>, vector<32x256xf32>, vector<2x256xf32> -> vector<2x256xf32>
    %c0_10 = arith.constant 0 : index
    %c256 = arith.constant 256 : index
    %9 = vector.load %arg2[%c0_10, %c256] : memref<2x1024xf32, #tpu.memory_space<vmem>>, vector<2x256xf32>
    tpu.vector_store %arg2[%c0_10, %c256], %8 {strides = array<i32>} : memref<2x1024xf32, #tpu.memory_space<vmem>>, vector<2x256xf32>,
    %c0_11 = arith.constant 0 : index
    %c64 = arith.constant 64 : index
    %10 = vector.load %arg0[%c0_11, %c64] : memref<2x128xf32, #tpu.memory_space<vmem>>, vector<2x32xf32>
    %c2 = arith.constant 2 : index
    %c0_12 = arith.constant 0 : index
    %c0_13 = arith.constant 0 : index
    %11 = vector.load %arg1[%c2, %c0_12, %c0_13] : memref<4x32x256xf32, #tpu.memory_space<vmem>>, vector<1x32x256xf32>
    %12 = vector.shape_cast %11 : vector<1x32x256xf32> to vector<32x256xf32>
    %cst_14 = arith.constant dense<0.000000e+00> : vector<2x256xf32>
    %13 = tpu.matmul %10, %12, %cst_14 {dimension_numbers = #tpu.dot_dimension_numbers<[1], [0], [0], [1], [0, 0, 1, 1], [], []>} : vector<2x32xf32>, vector<32x256xf32>, vector<2x256xf32> -> vector<2x256xf32>
    %c0_15 = arith.constant 0 : index
    %c512 = arith.constant 512 : index
    %14 = vector.load %arg2[%c0_15, %c512] : memref<2x1024xf32, #tpu.memory_space<vmem>>, vector<2x256xf32>
    tpu.vector_store %arg2[%c0_15, %c512], %13 {strides = array<i32>} : memref<2x1024xf32, #tpu.memory_space<vmem>>, vector<2x256xf32>,
    %c0_16 = arith.constant 0 : index
    %c96 = arith.constant 96 : index
    %15 = vector.load %arg0[%c0_16, %c96] : memref<2x128xf32, #tpu.memory_space<vmem>>, vector<2x32xf32>
    %c3 = arith.constant 3 : index
    %c0_17 = arith.constant 0 : index
    %c0_18 = arith.constant 0 : index
    %16 = vector.load %arg1[%c3, %c0_17, %c0_18] : memref<4x32x256xf32, #tpu.memory_space<vmem>>, vector<1x32x256xf32>
    %17 = vector.shape_cast %16 : vector<1x32x256xf32> to vector<32x256xf32>
    %cst_19 = arith.constant dense<0.000000e+00> : vector<2x256xf32>
    %18 = tpu.matmul %15, %17, %cst_19 {dimension_numbers = #tpu.dot_dimension_numbers<[1], [0], [0], [1], [0, 0, 1, 1], [], []>} : vector<2x32xf32>, vector<32x256xf32>, vector<2x256xf32> -> vector<2x256xf32>
    %c0_20 = arith.constant 0 : index
    %c768 = arith.constant 768 : index
    %19 = vector.load %arg2[%c0_20, %c768] : memref<2x1024xf32, #tpu.memory_space<vmem>>, vector<2x256xf32>
    tpu.vector_store %arg2[%c0_20, %c768], %18 {strides = array<i32>} : memref<2x1024xf32, #tpu.memory_space<vmem>>, vector<2x256xf32>,
    return
  }
}

</mosaic_0001>

<llo_original>
// kernel: tpu_custom_call.1
$region0: #{tpu_custom_call.1}
  #allocation0 [shape = 'u32[]', space=smem, size = 0x4, offset = 0x4, fixed_abs, tag = 'smem constant byte address 0x4 - core index']
  #allocation1 [shape = 'u32[144,128]{1,0:T(1,128)}', space=vmem, size = 0x12000, scoped, tag = 'internal scratch']
  %s0 = inlined_call_operand.hbm [shape: f32[2,128], index: 0, kind: input, shape index: {}]
  %s1 = inlined_call_operand.hbm [shape: f32[4,32,256], index: 1, kind: input, shape index: {}]
  %s2 = inlined_call_operand.hbm [shape: f32[2,1024], index: 2, kind: output, shape index: {}]
  %s3 = sld [smem:[#allocation0]]
  $region26: #{tpu_custom_call.1} parent=0
    _
  %s5 = ssub.s32 1, %s3
  %s6 = scalar_select 0, %s5, %s3
  $region1: #{tpu_custom_call.1} parent=0
    #allocation2 [shape = 'u8[1024]{0}', space=vmem, size = 0x400, scoped, tag = 'input window, operand 0, single buffered']
    #allocation3 [shape = 's32[1]{0}', space=sflag, size = 0x4, scoped, tag = 'scoped memory for tpu_custom_call.1']
    #allocation4 [shape = 's32[1]{0}', space=sflag, size = 0x4, scoped, tag = 'scoped memory for tpu_custom_call.1']
    #allocation5 [shape = 'u8[131072]{0}', space=vmem, size = 0x20000, scoped, tag = 'input window, operand 1, single buffered']
    #allocation6 [shape = 's32[1]{0}', space=sflag, size = 0x4, scoped, tag = 'scoped memory for tpu_custom_call.1']
    #allocation7 [shape = 'u8[8192]{0}', space=vmem, size = 0x2000, scoped, tag = 'output window, operand 0, single buffered']
    %7 = vsyncpa [#allocation3], 0
    %8 = vsyncpa [#allocation6], 0
    %9 = vsyncpa [#allocation4], 0
    // Predicated region
    $region2: #{tpu_custom_call.1} parent=1 // pred_check
      _
    $region3: #{tpu_custom_call.1} parent=1 // pred_check_branch
      %11 = sbr.rel (0) target = $region5
    $region4: #{tpu_custom_call.1} parent=1 // pred_region
      %s13 = ssub.s32 32, 32
      %14 = vsyncadd [#allocation3], %s13
      %s16 = sshll.u32 [#allocation2], 4
      %s17 = int_to_ptr.vmem [resolvable:$true] %s16
      %19 = dma.hbm_to_vmem [thread:$0]  %s0, 32, %s17, [#allocation3]
    $region5: #{tpu_custom_call.1} parent=1 // pred_fallthru
      _
    // Predicated region
    $region6: #{tpu_custom_call.1} parent=1 // pred_check
      _
    $region7: #{tpu_custom_call.1} parent=1 // pred_check_branch
      %21 = sbr.rel (0) target = $region9
    $region8: #{tpu_custom_call.1} parent=1 // pred_region
      %s23 = ssub.s32 4096, 4096
      %24 = vsyncadd [#allocation6], %s23
      %s25 = sshll.u32 [#allocation5], 4
      %s26 = int_to_ptr.vmem [resolvable:$true] %s25
      %31 = dma.hbm_to_vmem [thread:$0]  %s1, 4096, %s26, [#allocation6], 256, 256, 16
    $region9: #{tpu_custom_call.1} parent=1 // pred_fallthru
      _
    // Predicated region
    $region10: #{tpu_custom_call.1} parent=1 // pred_check
      _
    $region11: #{tpu_custom_call.1} parent=1 // pred_check_branch
      %33 = sbr.rel (0) target = $region13
    $region12: #{tpu_custom_call.1} parent=1 // pred_region
      %34 = dma.done [#allocation3], 32
    $region13: #{tpu_custom_call.1} parent=1 // pred_fallthru
      _
    // Predicated region
    $region14: #{tpu_custom_call.1} parent=1 // pred_check
      _
    $region15: #{tpu_custom_call.1} parent=1 // pred_check_branch
      %36 = sbr.rel (0) target = $region17
    $region16: #{tpu_custom_call.1} parent=1 // pred_region
      %37 = dma.done [#allocation6], 4096
    $region17: #{tpu_custom_call.1} parent=1 // pred_fallthru
      _
    %v38 = vld [vmem:[#allocation2] sm:$0x3]
    %v39 = vld [vmem:[#allocation5] sm:$0xff]
    %v40 = vld [vmem:[#allocation5 + $0x8] sm:$0xff]
    %v41 = vld [vmem:[#allocation5 + $0x10] sm:$0xff]
    %v42 = vld [vmem:[#allocation5 + $0x18] sm:$0xff]
    %v43 = vld [vmem:[#allocation5 + $0x20] sm:$0xff]
    %v44 = vld [vmem:[#allocation5 + $0x28] sm:$0xff]
    %v45 = vld [vmem:[#allocation5 + $0x30] sm:$0xff]
    %v46 = vld [vmem:[#allocation5 + $0x38] sm:$0xff]
    %vm47 = vcmask 261120
    %v49 = vsel %vm47, %v38, 0
    %51 = vmatprep.subr.mxu0 %v40
    %52 = vmatpush1.msra.mxu0 %v39
    %53 = vmatprep.subr.mxu0 %v42
    %54 = vmatpush1.msra.mxu0 %v41
    %55 = vmatprep.subr.mxu0 %v44
    %56 = vmatpush1.msra.mxu0 %v43
    %57 = vmatprep.subr.mxu0 %v46
    %58 = vmatpush1.msra.mxu0 %v45
    %59 = vmatprep.subr.mxu0 0.0
    %60 = vmatpush1.msra.mxu0 0.0
    %61 = vmatprep.subr.mxu0 0.0
    %62 = vmatpush1.msra.mxu0 0.0
    %63 = vmatprep.subr.mxu0 0.0
    %64 = vmatpush1.msra.mxu0 0.0
    %65 = vmatprep.subr.mxu0 0.0
    %66 = vmatpush1.msra.mxu0 0.0
    %67 = vmatprep.subr.mxu0 0.0
    %68 = vmatpush1.msra.mxu0 0.0
    %69 = vmatprep.subr.mxu0 0.0
    %70 = vmatpush1.msra.mxu0 0.0
    %71 = vmatprep.subr.mxu0 0.0
    %72 = vmatpush1.msra.mxu0 0.0
    %73 = vmatprep.subr.mxu0 0.0
    %74 = vmatpush1.msra.mxu0 0.0
    %75 = vmatprep.subr.mxu0 0.0
    %76 = vmatpush1.msra.mxu0 0.0
    %77 = vmatprep.subr.mxu0 0.0
    %78 = vmatpush1.msra.mxu0 0.0
    %79 = vmatprep.subr.mxu0 0.0
    %80 = vmatpush1.msra.mxu0 0.0
    %81 = vmatprep.subr.mxu0 0.0
    %82 = vmatpush1.msra.mxu0 0.0
    %83 = vmatprep.subr.mxu0 0.0
    %84 = vmatpush1.msra.mxu0 0.0
    %85 = vmatprep.subr.mxu0 0.0
    %86 = vmatpush1.msra.mxu0 0.0
    %87 = vmatprep.subr.mxu0 0.0
    %88 = vmatpush1.msra.mxu0 0.0
    %89 = vmatprep.subr.mxu0 0.0
    %90 = vmatpush1.msra.mxu0 0.0
    %91 = vmatprep.subr.mxu0 0.0
    %92 = vmatpush1.msra.mxu0 0.0
    %93 = vmatprep.subr.mxu0 0.0
    %94 = vmatpush1.msra.mxu0 0.0
    %95 = vmatprep.subr.mxu0 0.0
    %96 = vmatpush1.msra.mxu0 0.0
    %97 = vmatprep.subr.mxu0 0.0
    %98 = vmatpush1.msra.mxu0 0.0
    %99 = vmatprep.subr.mxu0 0.0
    %100 = vmatpush1.msra.mxu0 0.0
    %101 = vmatprep.subr.mxu0 0.0
    %102 = vmatpush1.msra.mxu0 0.0
    %103 = vmatprep.subr.mxu0 0.0
    %104 = vmatpush1.msra.mxu0 0.0
    %105 = vmatprep.subr.mxu0 0.0
    %106 = vmatpush1.msra.mxu0 0.0
    %107 = vmatprep.subr.mxu0 0.0
    %108 = vmatpush1.msra.mxu0 0.0
    %109 = vmatprep.subr.mxu0 0.0
    %110 = vmatpush1.msra.mxu0 0.0
    %111 = vmatprep.subr.mxu0 0.0
    %112 = vmatpush1.msra.mxu0 0.0
    %113 = vmatprep.subr.mxu0 0.0
    %114 = vmatpush1.msra.mxu0 0.0
    %115 = vmatprep.mubr.f32.mxu0 0.0
    %116 = vmatmul.mubr.f32.gmra.mrb[0].mxu0 %v49
    %v117 = vpop.f32.mrb[0].mxu0
    %v118 = vadd.f32 0.0, %v117
    %v119 = vpop.f32.mrb[0].mxu0
    %v120 = vadd.f32 0.0, %v119
    %121 = vdwg.mxu0
    %v124 = vcombine.low %v118, %v120
    %v126 = vunpack.c.l.s4 1983009808
    %v127 = vunpack.c.0.s8 %v126
    %v128 = vlaneseq
    %v129 = vshrl.u32 %v128, 7
    %v130 = vsub.s32 %v127, %v129
    %v131 = vrot.slane %v124, %v130
    %133 = vst [vmem:[#allocation7] sm:$0xf] %v131
    %v134 = vld [vmem:[#allocation2] sm:$0x3]
    %s135 = scalar_lea.vmem [#allocation5], 64
    %v136 = vld [vmem:[%s135] sm:$0xff]
    %v137 = vld [vmem:[%s135 + $0x8] sm:$0xff]
    %v138 = vld [vmem:[%s135 + $0x10] sm:$0xff]
    %v139 = vld [vmem:[%s135 + $0x18] sm:$0xff]
    %v140 = vld [vmem:[%s135 + $0x20] sm:$0xff]
    %v141 = vld [vmem:[%s135 + $0x28] sm:$0xff]
    %v142 = vld [vmem:[%s135 + $0x30] sm:$0xff]
    %v143 = vld [vmem:[%s135 + $0x38] sm:$0xff]
    %145 = vrot.lane.b32.xlu0 %v134, 96
    %v146 = vpop.permute.xlu0 %145
    %v147 = vsel %vm47, %v146, 0
    %149 = vmatprep.subr.mxu0 %v137
    %150 = vmatpush1.msra.mxu0 %v136
    %151 = vmatprep.subr.mxu0 %v139
    %152 = vmatpush1.msra.mxu0 %v138
    %153 = vmatprep.subr.mxu0 %v141
    %154 = vmatpush1.msra.mxu0 %v140
    %155 = vmatprep.subr.mxu0 %v143
    %156 = vmatpush1.msra.mxu0 %v142
    %157 = vmatprep.subr.mxu0 0.0
    %158 = vmatpush1.msra.mxu0 0.0
    %159 = vmatprep.subr.mxu0 0.0
    %160 = vmatpush1.msra.mxu0 0.0
    %161 = vmatprep.subr.mxu0 0.0
    %162 = vmatpush1.msra.mxu0 0.0
    %163 = vmatprep.subr.mxu0 0.0
    %164 = vmatpush1.msra.mxu0 0.0
    %165 = vmatprep.subr.mxu0 0.0
    %166 = vmatpush1.msra.mxu0 0.0
    %167 = vmatprep.subr.mxu0 0.0
    %168 = vmatpush1.msra.mxu0 0.0
    %169 = vmatprep.subr.mxu0 0.0
    %170 = vmatpush1.msra.mxu0 0.0
    %171 = vmatprep.subr.mxu0 0.0
    %172 = vmatpush1.msra.mxu0 0.0
    %173 = vmatprep.subr.mxu0 0.0
    %174 = vmatpush1.msra.mxu0 0.0
    %175 = vmatprep.subr.mxu0 0.0
    %176 = vmatpush1.msra.mxu0 0.0
    %177 = vmatprep.subr.mxu0 0.0
    %178 = vmatpush1.msra.mxu0 0.0
    %179 = vmatprep.subr.mxu0 0.0
    %180 = vmatpush1.msra.mxu0 0.0
    %181 = vmatprep.subr.mxu0 0.0
    %182 = vmatpush1.msra.mxu0 0.0
    %183 = vmatprep.subr.mxu0 0.0
    %184 = vmatpush1.msra.mxu0 0.0
    %185 = vmatprep.subr.mxu0 0.0
    %186 = vmatpush1.msra.mxu0 0.0
    %187 = vmatprep.subr.mxu0 0.0
    %188 = vmatpush1.msra.mxu0 0.0
    %189 = vmatprep.subr.mxu0 0.0
    %190 = vmatpush1.msra.mxu0 0.0
    %191 = vmatprep.subr.mxu0 0.0
    %192 = vmatpush1.msra.mxu0 0.0
    %193 = vmatprep.subr.mxu0 0.0
    %194 = vmatpush1.msra.mxu0 0.0
    %195 = vmatprep.subr.mxu0 0.0
    %196 = vmatpush1.msra.mxu0 0.0
    %197 = vmatprep.subr.mxu0 0.0
    %198 = vmatpush1.msra.mxu0 0.0
    %199 = vmatprep.subr.mxu0 0.0
    %200 = vmatpush1.msra.mxu0 0.0
    %201 = vmatprep.subr.mxu0 0.0
    %202 = vmatpush1.msra.mxu0 0.0
    %203 = vmatprep.subr.mxu0 0.0
    %204 = vmatpush1.msra.mxu0 0.0
    %205 = vmatprep.subr.mxu0 0.0
    %206 = vmatpush1.msra.mxu0 0.0
    %207 = vmatprep.subr.mxu0 0.0
    %208 = vmatpush1.msra.mxu0 0.0
    %209 = vmatprep.subr.mxu0 0.0
    %210 = vmatpush1.msra.mxu0 0.0
    %211 = vmatprep.subr.mxu0 0.0
    %212 = vmatpush1.msra.mxu0 0.0
    %213 = vmatprep.mubr.f32.mxu0 0.0
    %214 = vmatmul.mubr.f32.gmra.mrb[0].mxu0 %v147
    %v215 = vpop.f32.mrb[0].mxu0
    %v216 = vadd.f32 0.0, %v215
    %v217 = vpop.f32.mrb[0].mxu0
    %v218 = vadd.f32 0.0, %v217
    %219 = vdwg.mxu0
    %v222 = vcombine.low %v216, %v218
    %v224 = vunpack.c.l.s4 1983009808
    %v225 = vunpack.c.0.s8 %v224
    %v226 = vlaneseq
    %v227 = vshrl.u32 %v226, 7
    %v228 = vsub.s32 %v225, %v227
    %v229 = vrot.slane %v222, %v228
    %231 = vst [vmem:[#allocation7 + $0x4] sm:$0xf] %v229
    %v232 = vld [vmem:[#allocation2] sm:$0x3]
    %s233 = scalar_lea.vmem [#allocation5], 128
    %v234 = vld [vmem:[%s233] sm:$0xff]
    %v235 = vld [vmem:[%s233 + $0x8] sm:$0xff]
    %v236 = vld [vmem:[%s233 + $0x10] sm:$0xff]
    %v237 = vld [vmem:[%s233 + $0x18] sm:$0xff]
    %v238 = vld [vmem:[%s233 + $0x20] sm:$0xff]
    %v239 = vld [vmem:[%s233 + $0x28] sm:$0xff]
    %v240 = vld [vmem:[%s233 + $0x30] sm:$0xff]
    %v241 = vld [vmem:[%s233 + $0x38] sm:$0xff]
    %243 = vrot.lane.b32.xlu0 %v232, 64
    %v244 = vpop.permute.xlu0 %243
    %v245 = vsel %vm47, %v244, 0
    %247 = vmatprep.subr.mxu0 %v235
    %248 = vmatpush1.msra.mxu0 %v234
    %249 = vmatprep.subr.mxu0 %v237
    %250 = vmatpush1.msra.mxu0 %v236
    %251 = vmatprep.subr.mxu0 %v239
    %252 = vmatpush1.msra.mxu0 %v238
    %253 = vmatprep.subr.mxu0 %v241
    %254 = vmatpush1.msra.mxu0 %v240
    %255 = vmatprep.subr.mxu0 0.0
    %256 = vmatpush1.msra.mxu0 0.0
    %257 = vmatprep.subr.mxu0 0.0
    %258 = vmatpush1.msra.mxu0 0.0
    %259 = vmatprep.subr.mxu0 0.0
    %260 = vmatpush1.msra.mxu0 0.0
    %261 = vmatprep.subr.mxu0 0.0
    %262 = vmatpush1.msra.mxu0 0.0
    %263 = vmatprep.subr.mxu0 0.0
    %264 = vmatpush1.msra.mxu0 0.0
    %265 = vmatprep.subr.mxu0 0.0
    %266 = vmatpush1.msra.mxu0 0.0
    %267 = vmatprep.subr.mxu0 0.0
    %268 = vmatpush1.msra.mxu0 0.0
    %269 = vmatprep.subr.mxu0 0.0
    %270 = vmatpush1.msra.mxu0 0.0
    %271 = vmatprep.subr.mxu0 0.0
    %272 = vmatpush1.msra.mxu0 0.0
    %273 = vmatprep.subr.mxu0 0.0
    %274 = vmatpush1.msra.mxu0 0.0
    %275 = vmatprep.subr.mxu0 0.0
    %276 = vmatpush1.msra.mxu0 0.0
    %277 = vmatprep.subr.mxu0 0.0
    %278 = vmatpush1.msra.mxu0 0.0
    %279 = vmatprep.subr.mxu0 0.0
    %280 = vmatpush1.msra.mxu0 0.0
    %281 = vmatprep.subr.mxu0 0.0
    %282 = vmatpush1.msra.mxu0 0.0
    %283 = vmatprep.subr.mxu0 0.0
    %284 = vmatpush1.msra.mxu0 0.0
    %285 = vmatprep.subr.mxu0 0.0
    %286 = vmatpush1.msra.mxu0 0.0
    %287 = vmatprep.subr.mxu0 0.0
    %288 = vmatpush1.msra.mxu0 0.0
    %289 = vmatprep.subr.mxu0 0.0
    %290 = vmatpush1.msra.mxu0 0.0
    %291 = vmatprep.subr.mxu0 0.0
    %292 = vmatpush1.msra.mxu0 0.0
    %293 = vmatprep.subr.mxu0 0.0
    %294 = vmatpush1.msra.mxu0 0.0
    %295 = vmatprep.subr.mxu0 0.0
    %296 = vmatpush1.msra.mxu0 0.0
    %297 = vmatprep.subr.mxu0 0.0
    %298 = vmatpush1.msra.mxu0 0.0
    %299 = vmatprep.subr.mxu0 0.0
    %300 = vmatpush1.msra.mxu0 0.0
    %301 = vmatprep.subr.mxu0 0.0
    %302 = vmatpush1.msra.mxu0 0.0
    %303 = vmatprep.subr.mxu0 0.0
    %304 = vmatpush1.msra.mxu0 0.0
    %305 = vmatprep.subr.mxu0 0.0
    %306 = vmatpush1.msra.mxu0 0.0
    %307 = vmatprep.subr.mxu0 0.0
    %308 = vmatpush1.msra.mxu0 0.0
    %309 = vmatprep.subr.mxu0 0.0
    %310 = vmatpush1.msra.mxu0 0.0
    %311 = vmatprep.mubr.f32.mxu0 0.0
    %312 = vmatmul.mubr.f32.gmra.mrb[0].mxu0 %v245
    %v313 = vpop.f32.mrb[0].mxu0
    %v314 = vadd.f32 0.0, %v313
    %v315 = vpop.f32.mrb[0].mxu0
    %v316 = vadd.f32 0.0, %v315
    %317 = vdwg.mxu0
    %v320 = vcombine.low %v314, %v316
    %v322 = vunpack.c.l.s4 1983009808
    %v323 = vunpack.c.0.s8 %v322
    %v324 = vlaneseq
    %v325 = vshrl.u32 %v324, 7
    %v326 = vsub.s32 %v323, %v325
    %v327 = vrot.slane %v320, %v326
    %329 = vst [vmem:[#allocation7 + $0x8] sm:$0xf] %v327
    %v330 = vld [vmem:[#allocation2] sm:$0x3]
    %s331 = scalar_lea.vmem [#allocation5], 192
    %v332 = vld [vmem:[%s331] sm:$0xff]
    %v333 = vld [vmem:[%s331 + $0x8] sm:$0xff]
    %v334 = vld [vmem:[%s331 + $0x10] sm:$0xff]
    %v335 = vld [vmem:[%s331 + $0x18] sm:$0xff]
    %v336 = vld [vmem:[%s331 + $0x20] sm:$0xff]
    %v337 = vld [vmem:[%s331 + $0x28] sm:$0xff]
    %v338 = vld [vmem:[%s331 + $0x30] sm:$0xff]
    %v339 = vld [vmem:[%s331 + $0x38] sm:$0xff]
    %341 = vrot.lane.b32.xlu0 %v330, 32
    %v342 = vpop.permute.xlu0 %341
    %v343 = vsel %vm47, %v342, 0
    %345 = vmatprep.subr.mxu0 %v333
    %346 = vmatpush1.msra.mxu0 %v332
    %347 = vmatprep.subr.mxu0 %v335
    %348 = vmatpush1.msra.mxu0 %v334
    %349 = vmatprep.subr.mxu0 %v337
    %350 = vmatpush1.msra.mxu0 %v336
    %351 = vmatprep.subr.mxu0 %v339
    %352 = vmatpush1.msra.mxu0 %v338
    %353 = vmatprep.subr.mxu0 0.0
    %354 = vmatpush1.msra.mxu0 0.0
    %355 = vmatprep.subr.mxu0 0.0
    %356 = vmatpush1.msra.mxu0 0.0
    %357 = vmatprep.subr.mxu0 0.0
    %358 = vmatpush1.msra.mxu0 0.0
    %359 = vmatprep.subr.mxu0 0.0
    %360 = vmatpush1.msra.mxu0 0.0
    %361 = vmatprep.subr.mxu0 0.0
    %362 = vmatpush1.msra.mxu0 0.0
    %363 = vmatprep.subr.mxu0 0.0
    %364 = vmatpush1.msra.mxu0 0.0
    %365 = vmatprep.subr.mxu0 0.0
    %366 = vmatpush1.msra.mxu0 0.0
    %367 = vmatprep.subr.mxu0 0.0
    %368 = vmatpush1.msra.mxu0 0.0
    %369 = vmatprep.subr.mxu0 0.0
    %370 = vmatpush1.msra.mxu0 0.0
    %371 = vmatprep.subr.mxu0 0.0
    %372 = vmatpush1.msra.mxu0 0.0
    %373 = vmatprep.subr.mxu0 0.0
    %374 = vmatpush1.msra.mxu0 0.0
    %375 = vmatprep.subr.mxu0 0.0
    %376 = vmatpush1.msra.mxu0 0.0
    %377 = vmatprep.subr.mxu0 0.0
    %378 = vmatpush1.msra.mxu0 0.0
    %379 = vmatprep.subr.mxu0 0.0
    %380 = vmatpush1.msra.mxu0 0.0
    %381 = vmatprep.subr.mxu0 0.0
    %382 = vmatpush1.msra.mxu0 0.0
    %383 = vmatprep.subr.mxu0 0.0
    %384 = vmatpush1.msra.mxu0 0.0
    %385 = vmatprep.subr.mxu0 0.0
    %386 = vmatpush1.msra.mxu0 0.0
    %387 = vmatprep.subr.mxu0 0.0
    %388 = vmatpush1.msra.mxu0 0.0
    %389 = vmatprep.subr.mxu0 0.0
    %390 = vmatpush1.msra.mxu0 0.0
    %391 = vmatprep.subr.mxu0 0.0
    %392 = vmatpush1.msra.mxu0 0.0
    %393 = vmatprep.subr.mxu0 0.0
    %394 = vmatpush1.msra.mxu0 0.0
    %395 = vmatprep.subr.mxu0 0.0
    %396 = vmatpush1.msra.mxu0 0.0
    %397 = vmatprep.subr.mxu0 0.0
    %398 = vmatpush1.msra.mxu0 0.0
    %399 = vmatprep.subr.mxu0 0.0
    %400 = vmatpush1.msra.mxu0 0.0
    %401 = vmatprep.subr.mxu0 0.0
    %402 = vmatpush1.msra.mxu0 0.0
    %403 = vmatprep.subr.mxu0 0.0
    %404 = vmatpush1.msra.mxu0 0.0
    %405 = vmatprep.subr.mxu0 0.0
    %406 = vmatpush1.msra.mxu0 0.0
    %407 = vmatprep.subr.mxu0 0.0
    %408 = vmatpush1.msra.mxu0 0.0
    %409 = vmatprep.mubr.f32.mxu0 0.0
    %410 = vmatmul.mubr.f32.gmra.mrb[0].mxu0 %v343
    %v411 = vpop.f32.mrb[0].mxu0
    %v412 = vadd.f32 0.0, %v411
    %v413 = vpop.f32.mrb[0].mxu0
    %v414 = vadd.f32 0.0, %v413
    %415 = vdwg.mxu0
    %v418 = vcombine.low %v412, %v414
    %v420 = vunpack.c.l.s4 1983009808
    %v421 = vunpack.c.0.s8 %v420
    %v422 = vlaneseq
    %v423 = vshrl.u32 %v422, 7
    %v424 = vsub.s32 %v421, %v423
    %v425 = vrot.slane %v418, %v424
    %427 = vst [vmem:[#allocation7 + $0xc] sm:$0xf] %v425
    // Predicated region
    $region18: #{tpu_custom_call.1} parent=1 // pred_check
      _
    $region19: #{tpu_custom_call.1} parent=1 // pred_check_branch
      %429 = sbr.rel (0) target = $region21
    $region20: #{tpu_custom_call.1} parent=1 // pred_region
      %s431 = ssub.s32 256, 256
      %432 = vsyncadd [#allocation4], %s431
      %s434 = sshll.u32 [#allocation7], 4
      %s435 = int_to_ptr.vmem [resolvable:$true] %s434
      %437 = dma.vmem_to_hbm [thread:$0]  %s435, 256, %s2, [#allocation4]
    $region21: #{tpu_custom_call.1} parent=1 // pred_fallthru
      _
    // Predicated region
    $region22: #{tpu_custom_call.1} parent=1 // pred_check
      _
    $region23: #{tpu_custom_call.1} parent=1 // pred_check_branch
      %439 = sbr.rel (0) target = $region25
    $region24: #{tpu_custom_call.1} parent=1 // pred_region
      %440 = dma.done [#allocation4], 256
    $region25: #{tpu_custom_call.1} parent=1 // pred_fallthru
      _
    %441 = vsyncpa [#allocation3], 1
    %442 = vsyncpa [#allocation6], 1
    %443 = vsyncpa [#allocation4], 1

</llo_original>
